<compile_context>
chip_gen: v5e
topology: v5e:2x2
jax: 0.10.0
libtpu: 0.0.40
codegen_flags: <defaults>
</compile_context>

<pallas_src>
import math

import jax
import jax.numpy as jnp
from jax.experimental import pallas as pl
from jax.experimental.pallas import tpu as pltpu


def _round_up(x, m):
    return (x + m - 1) // m * m


def _make_mlp_kernel(num_layers, dims_pad, compute_dtype):
    """Fused MLP kernel: all layers computed on one VMEM-resident row tile.

    refs = (x, w_0..w_{L-1}, b_0..b_{L-1}, out[, act_scratch]).
    """

    def kernel(*refs):
        x_ref = refs[0]
        w_refs = refs[1:1 + num_layers]
        b_refs = refs[1 + num_layers:1 + 2 * num_layers]
        o_ref = refs[1 + 2 * num_layers]
        act = refs[2 + 2 * num_layers] if num_layers > 1 else None

        x = x_ref[...]                                    # (tm, d0_pad), compute dtype
        for l in range(num_layers):                       # static unroll
            d_out = dims_pad[l + 1]
            # bf16 MXU matmul, f32 accumulation.
            y = jnp.dot(x, w_refs[l][...], preferred_element_type=jnp.float32)
            y = y + b_refs[l][...]                        # f32 bias, broadcast over rows
            if l < num_layers - 1:
                y = jnp.maximum(y, 0.0)                   # ReLU on all but the last layer
                y = y.astype(compute_dtype)
                act[:, :d_out] = y                        # stays in VMEM, bounds live range
                x = act[:, :d_out]
            else:
                o_ref[...] = y.astype(o_ref.dtype)

    return kernel


def _pick_tm(m, resident_bytes, d_in_pad, d_out_pad, hid_pad,
             x_bytes, out_bytes, act_bytes):
    """Largest row tile whose pipelined tiles + scratch fit a v7x-safe budget."""
    if m < 128:
        return _round_up(max(m, 8), 8)
    budget = (48 << 20) - resident_bytes                  # ~48 MiB keeps v7x (64 MiB/TC) safe
    for tm in (512, 256):
        tile_bytes = (2 * tm * d_in_pad * x_bytes         # double-buffered x tile
                      + 2 * tm * d_out_pad * out_bytes    # double-buffered out tile
                      + tm * hid_pad * act_bytes)         # activation scratch
        if tile_bytes <= budget and 2 * tm <= _round_up(m, tm):
            return tm                                     # amortize per-step overhead, grid >= 2
    return 128


def mlp_forward_pallas(x, weights_pad, biases_pad, dims, dims_pad,
                       compute_dtype=jnp.bfloat16):
    """x: [..., input_dim]; weights_pad[l]: (in_pad, out_pad); biases_pad[l]: (1, out_pad)."""
    num_layers = len(weights_pad)
    lead = x.shape[:-1]
    out_dtype = x.dtype
    xm = x.reshape(-1, x.shape[-1])
    m = xm.shape[0]

    w_bytes = sum(w.size * w.dtype.itemsize for w in weights_pad)
    b_bytes = sum(b.size * b.dtype.itemsize for b in biases_pad)
    x_itemsize = jnp.dtype(compute_dtype).itemsize
    out_itemsize = jnp.dtype(out_dtype).itemsize
    hid_pad = max(dims_pad[1:-1]) if num_layers > 1 else 0

    tm = _pick_tm(m, w_bytes + b_bytes, dims_pad[0], dims_pad[-1], hid_pad,
                  x_itemsize, out_itemsize, x_itemsize)
    m_pad = _round_up(m, tm)

    # Pad rows to the tile and features to the lane width; padded entries are
    # zero (weights/biases are zero-padded too) so the math is unchanged.
    # Casting to the compute dtype here halves activation HBM traffic.
    x_pad = (jnp.zeros((m_pad, dims_pad[0]), compute_dtype)
             .at[:m, :dims[0]].set(xm.astype(compute_dtype)))

    flops = 2 * m_pad * sum(dims_pad[l] * dims_pad[l + 1] for l in range(num_layers))
    bytes_accessed = (x_pad.size * x_itemsize + w_bytes + b_bytes
                      + m_pad * dims_pad[-1] * out_itemsize)

    def build(single_buffer_weights):
        # Weights/biases: constant index_map -> fetched once and VMEM-resident
        # for every row tile.  Buffered(1) avoids paying 2x VMEM for operands
        # that are never re-fetched.
        wb_kwargs = (dict(pipeline_mode=pl.Buffered(1))
                     if single_buffer_weights else {})
        in_specs = [pl.BlockSpec((tm, dims_pad[0]), lambda i: (i, 0))]
        for w in weights_pad:
            in_specs.append(pl.BlockSpec(w.shape, lambda i: (0, 0), **wb_kwargs))
        for b in biases_pad:
            in_specs.append(pl.BlockSpec(b.shape, lambda i: (0, 0), **wb_kwargs))

        scratch_shapes = ([pltpu.VMEM((tm, hid_pad), compute_dtype)]
                          if num_layers > 1 else [])

        # Explicit VMEM budget: default scoped VMEM (16/32 MiB) is far below
        # what the resident-weight design needs at realistic sizes.
        wb_factor = 1 if single_buffer_weights else 2
        vmem_bytes = (wb_factor * (w_bytes + b_bytes)
                      + 2 * tm * dims_pad[0] * x_itemsize
                      + 2 * tm * dims_pad[-1] * out_itemsize
                      + (tm * hid_pad * x_itemsize if num_layers > 1 else 0))
        vmem_limit = min(max(int(vmem_bytes * 1.25) + (2 << 20), 8 << 20), 100 << 20)

        return pl.pallas_call(
            _make_mlp_kernel(num_layers, tuple(dims_pad), compute_dtype),
            out_shape=jax.ShapeDtypeStruct((m_pad, dims_pad[-1]), out_dtype),
            grid=(m_pad // tm,),
            in_specs=in_specs,
            out_specs=pl.BlockSpec((tm, dims_pad[-1]), lambda i: (i, 0)),
            scratch_shapes=scratch_shapes,
            compiler_params=pltpu.CompilerParams(
                # Row tiles are independent -> shard across both TCs on v7x.
                dimension_semantics=("parallel",),
                vmem_limit_bytes=vmem_limit),
            cost_estimate=pl.CostEstimate(
                flops=flops, transcendentals=0, bytes_accessed=bytes_accessed),
        )

    # TODO(synk): when bf16 weights alone exceed ~48 MiB (v7x per-TC budget),
    # stream weights over an inner "arbitrary" K/N grid axis with an f32
    # accumulator instead of keeping all layers VMEM-resident.
    try:
        out = build(single_buffer_weights=True)(x_pad, *weights_pad, *biases_pad)
    except Exception:
        # Fallback if this JAX build rejects pipeline_mode=pl.Buffered(1).
        out = build(single_buffer_weights=False)(x_pad, *weights_pad, *biases_pad)

    if m_pad == m and dims_pad[-1] == dims[-1]:
        return out.reshape(*lead, dims[-1])               # skip redundant HBM copy
    return out[:m, :dims[-1]].reshape(*lead, dims[-1])


class MLP:
    """JAX/Pallas port of the PyTorch MLP (FFN): Linear (+ReLU except last layer)."""

    def __init__(self, input_dim, hidden_dim, output_dim, num_layers, key,
                 compute_dtype=jnp.bfloat16):
        self.num_layers = num_layers
        self.compute_dtype = compute_dtype
        h = [hidden_dim] * (num_layers - 1)
        layer_dims = list(zip([input_dim] + h, h + [output_dim]))
        self.dims = [input_dim] + h + [output_dim]
        self.dims_pad = [_round_up(d, 128) for d in self.dims]

        self.weights = []       # (in, out), unpadded f32 (reference check)
        self.biases = []        # (1, out), unpadded f32
        self.weights_pad = []   # (in_pad, out_pad), zero-padded, bf16 kernel operands
        self.biases_pad = []    # (1, out_pad), zero-padded, f32 (f32 epilogue, v5e-safe)
        for l, (n, k) in enumerate(layer_dims):
            key, wk, bk = jax.random.split(key, 3)
            # deterministic init ~ PyTorch's kaiming-uniform-ish bound 1/sqrt(n)
            bound = 1.0 / math.sqrt(n)
            w = jax.random.uniform(wk, (k, n), jnp.float32, -bound, bound)  # torch (out, in)
            b = jax.random.uniform(bk, (k,), jnp.float32, -bound, bound)
            w_t = jnp.transpose(w)               # (in, out)
            b2 = b.reshape(1, k)
            self.weights.append(w_t)
            self.biases.append(b2)
            ip, op = self.dims_pad[l], self.dims_pad[l + 1]
            self.weights_pad.append(
                jnp.zeros((ip, op), compute_dtype).at[:n, :k]
                .set(w_t.astype(compute_dtype)))
            self.biases_pad.append(
                jnp.zeros((1, op), jnp.float32).at[:, :k].set(b2))

    def __call__(self, x):
        return mlp_forward_pallas(x, self.weights_pad, self.biases_pad,
                                  self.dims, self.dims_pad, self.compute_dtype)


if __name__ == "__main__":
    key = jax.random.PRNGKey(0)
    key, xkey, pkey = jax.random.split(key, 3)

    # Small shapes consistent with the module's forward:
    # batch=2, seq=8, input_dim=16, hidden_dim=32, output_dim=8, num_layers=3
    batch, seq, input_dim, hidden_dim, output_dim, num_layers = 2, 8, 16, 32, 8, 3
    x = jax.random.normal(xkey, (batch, seq, input_dim), jnp.float32)

    mlp = MLP(input_dim, hidden_dim, output_dim, num_layers, pkey)
    out = jax.block_until_ready(mlp(x))

    # Reference check in plain JAX (f32, unpadded weights).  The kernel uses
    # bf16 weights/activations with f32 accumulation, so compare with
    # bf16-level tolerance.
    ref = x.reshape(-1, input_dim)
    for i in range(num_layers):
        ref = ref @ mlp.weights[i] + mlp.biases[i]
        if i < num_layers - 1:
            ref = jnp.maximum(ref, 0.0)
    ref = ref.reshape(batch, seq, output_dim)

    assert out.shape == (batch, seq, output_dim)
    err = float(jnp.max(jnp.abs(out.astype(jnp.float32) - ref)))
    assert err < 3e-2, err

    print("KERNEL_OK")
</pallas_src>

<mosaic_0001>
module attributes {stable_mosaic.version = 11 : i64} {
  func.func @kernel(%arg0: i32, %arg1: memref<16x128xbf16, #tpu.memory_space<vmem>>, %arg2: memref<128x128xbf16, #tpu.memory_space<vmem>>, %arg3: memref<128x128xbf16, #tpu.memory_space<vmem>>, %arg4: memref<128x128xbf16, #tpu.memory_space<vmem>>, %arg5: memref<1x128xf32, #tpu.memory_space<vmem>>, %arg6: memref<1x128xf32, #tpu.memory_space<vmem>>, %arg7: memref<1x128xf32, #tpu.memory_space<vmem>>, %arg8: memref<16x128xf32, #tpu.memory_space<vmem>>, %arg9: memref<16x128xbf16, #tpu.memory_space<vmem>>) attributes {dimension_semantics = [#tpu.dimension_semantics<parallel>], iteration_bounds = array<i64: 1>, scalar_prefetch = 0 : i64, scratch_operands = 1 : i64, tpu.core_type = #tpu.core_type<tc>, window_params = [{transform_indices = @transform_0, window_bounds = array<i64: 16, 128>}, {pipeline_mode = #tpu.pipeline_mode<synchronous>, transform_indices = @transform_1, window_bounds = array<i64: 128, 128>}, {pipeline_mode = #tpu.pipeline_mode<synchronous>, transform_indices = @transform_2, window_bounds = array<i64: 128, 128>}, {pipeline_mode = #tpu.pipeline_mode<synchronous>, transform_indices = @transform_3, window_bounds = array<i64: 128, 128>}, {pipeline_mode = #tpu.pipeline_mode<synchronous>, transform_indices = @transform_4, window_bounds = array<i64: 1, 128>}, {pipeline_mode = #tpu.pipeline_mode<synchronous>, transform_indices = @transform_5, window_bounds = array<i64: 1, 128>}, {pipeline_mode = #tpu.pipeline_mode<synchronous>, transform_indices = @transform_6, window_bounds = array<i64: 1, 128>}, {transform_indices = @transform_7, window_bounds = array<i64: 16, 128>}]} {
    %c0 = arith.constant 0 : index
    %c0_0 = arith.constant 0 : index
    %0 = vector.load %arg1[%c0, %c0_0] : memref<16x128xbf16, #tpu.memory_space<vmem>>, vector<16x128xbf16>
    %c0_1 = arith.constant 0 : index
    %c0_2 = arith.constant 0 : index
    %1 = vector.load %arg2[%c0_1, %c0_2] : memref<128x128xbf16, #tpu.memory_space<vmem>>, vector<128x128xbf16>
    %cst = arith.constant dense<0.000000e+00> : vector<16x128xf32>
    %2 = tpu.matmul %0, %1, %cst {dimension_numbers = #tpu.dot_dimension_numbers<[1], [0], [0], [1], [0, 0, 1, 1], [], []>} : vector<16x128xbf16>, vector<128x128xbf16>, vector<16x128xf32> -> vector<16x128xf32>
    %c0_3 = arith.constant 0 : index
    %c0_4 = arith.constant 0 : index
    %3 = vector.load %arg5[%c0_3, %c0_4] : memref<1x128xf32, #tpu.memory_space<vmem>>, vector<1x128xf32>
    %4 = vector.broadcast %3 : vector<1x128xf32> to vector<16x128xf32>
    %5 = arith.addf %2, %4 : vector<16x128xf32>
    %cst_5 = arith.constant 0.000000e+00 : f32
    %6 = vector.broadcast %cst_5 : f32 to vector<16x128xf32>
    %7 = arith.maximumf %5, %6 : vector<16x128xf32>
    %8 = arith.truncf %7 : vector<16x128xf32> to vector<16x128xbf16>
    %c0_6 = arith.constant 0 : index
    %c0_7 = arith.constant 0 : index
    %9 = vector.load %arg9[%c0_6, %c0_7] : memref<16x128xbf16, #tpu.memory_space<vmem>>, vector<16x128xbf16>
    tpu.vector_store %arg9[%c0_6, %c0_7], %8 {strides = array<i32>} : memref<16x128xbf16, #tpu.memory_space<vmem>>, vector<16x128xbf16>,
    %c0_8 = arith.constant 0 : index
    %c0_9 = arith.constant 0 : index
    %10 = vector.load %arg9[%c0_8, %c0_9] : memref<16x128xbf16, #tpu.memory_space<vmem>>, vector<16x128xbf16>
    %c0_10 = arith.constant 0 : index
    %c0_11 = arith.constant 0 : index
    %11 = vector.load %arg3[%c0_10, %c0_11] : memref<128x128xbf16, #tpu.memory_space<vmem>>, vector<128x128xbf16>
    %cst_12 = arith.constant dense<0.000000e+00> : vector<16x128xf32>
    %12 = tpu.matmul %10, %11, %cst_12 {dimension_numbers = #tpu.dot_dimension_numbers<[1], [0], [0], [1], [0, 0, 1, 1], [], []>} : vector<16x128xbf16>, vector<128x128xbf16>, vector<16x128xf32> -> vector<16x128xf32>
    %c0_13 = arith.constant 0 : index
    %c0_14 = arith.constant 0 : index
    %13 = vector.load %arg6[%c0_13, %c0_14] : memref<1x128xf32, #tpu.memory_space<vmem>>, vector<1x128xf32>
    %14 = vector.broadcast %13 : vector<1x128xf32> to vector<16x128xf32>
    %15 = arith.addf %12, %14 : vector<16x128xf32>
    %cst_15 = arith.constant 0.000000e+00 : f32
    %16 = vector.broadcast %cst_15 : f32 to vector<16x128xf32>
    %17 = arith.maximumf %15, %16 : vector<16x128xf32>
    %18 = arith.truncf %17 : vector<16x128xf32> to vector<16x128xbf16>
    %c0_16 = arith.constant 0 : index
    %c0_17 = arith.constant 0 : index
    %19 = vector.load %arg9[%c0_16, %c0_17] : memref<16x128xbf16, #tpu.memory_space<vmem>>, vector<16x128xbf16>
    tpu.vector_store %arg9[%c0_16, %c0_17], %18 {strides = array<i32>} : memref<16x128xbf16, #tpu.memory_space<vmem>>, vector<16x128xbf16>,
    %c0_18 = arith.constant 0 : index
    %c0_19 = arith.constant 0 : index
    %20 = vector.load %arg9[%c0_18, %c0_19] : memref<16x128xbf16, #tpu.memory_space<vmem>>, vector<16x128xbf16>
    %c0_20 = arith.constant 0 : index
    %c0_21 = arith.constant 0 : index
    %21 = vector.load %arg4[%c0_20, %c0_21] : memref<128x128xbf16, #tpu.memory_space<vmem>>, vector<128x128xbf16>
    %cst_22 = arith.constant dense<0.000000e+00> : vector<16x128xf32>
    %22 = tpu.matmul %20, %21, %cst_22 {dimension_numbers = #tpu.dot_dimension_numbers<[1], [0], [0], [1], [0, 0, 1, 1], [], []>} : vector<16x128xbf16>, vector<128x128xbf16>, vector<16x128xf32> -> vector<16x128xf32>
    %c0_23 = arith.constant 0 : index
    %c0_24 = arith.constant 0 : index
    %23 = vector.load %arg7[%c0_23, %c0_24] : memref<1x128xf32, #tpu.memory_space<vmem>>, vector<1x128xf32>
    %24 = vector.broadcast %23 : vector<1x128xf32> to vector<16x128xf32>
    %25 = arith.addf %22, %24 : vector<16x128xf32>
    %c0_25 = arith.constant 0 : index
    %c0_26 = arith.constant 0 : index
    %26 = vector.load %arg8[%c0_25, %c0_26] : memref<16x128xf32, #tpu.memory_space<vmem>>, vector<16x128xf32>
    tpu.vector_store %arg8[%c0_25, %c0_26], %25 {strides = array<i32>} : memref<16x128xf32, #tpu.memory_space<vmem>>, vector<16x128xf32>,
    return
  }
  func.func @transform_0(%arg0: i32) -> (i32, i32) {
    %c0_i32 = arith.constant 0 : i32
    %c0_i32_0 = arith.constant 0 : i32
    return %arg0, %c0_i32 : i32, i32
  }
  func.func @transform_1(%arg0: i32) -> (i32, i32) {
    %c0_i32 = arith.constant 0 : i32
    %c0_i32_0 = arith.constant 0 : i32
    %c0_i32_1 = arith.constant 0 : i32
    return %c0_i32, %c0_i32_0 : i32, i32
  }
  func.func @transform_2(%arg0: i32) -> (i32, i32) {
    %c0_i32 = arith.constant 0 : i32
    %c0_i32_0 = arith.constant 0 : i32
    %c0_i32_1 = arith.constant 0 : i32
    return %c0_i32, %c0_i32_0 : i32, i32
  }
  func.func @transform_3(%arg0: i32) -> (i32, i32) {
    %c0_i32 = arith.constant 0 : i32
    %c0_i32_0 = arith.constant 0 : i32
    %c0_i32_1 = arith.constant 0 : i32
    return %c0_i32, %c0_i32_0 : i32, i32
  }
  func.func @transform_4(%arg0: i32) -> (i32, i32) {
    %c0_i32 = arith.constant 0 : i32
    %c0_i32_0 = arith.constant 0 : i32
    %c0_i32_1 = arith.constant 0 : i32
    return %c0_i32, %c0_i32_0 : i32, i32
  }
  func.func @transform_5(%arg0: i32) -> (i32, i32) {
    %c0_i32 = arith.constant 0 : i32
    %c0_i32_0 = arith.constant 0 : i32
    %c0_i32_1 = arith.constant 0 : i32
    return %c0_i32, %c0_i32_0 : i32, i32
  }
  func.func @transform_6(%arg0: i32) -> (i32, i32) {
    %c0_i32 = arith.constant 0 : i32
    %c0_i32_0 = arith.constant 0 : i32
    %c0_i32_1 = arith.constant 0 : i32
    return %c0_i32, %c0_i32_0 : i32, i32
  }
  func.func @transform_7(%arg0: i32) -> (i32, i32) {
    %c0_i32 = arith.constant 0 : i32
    %c0_i32_0 = arith.constant 0 : i32
    return %arg0, %c0_i32 : i32, i32
  }
}

module attributes {stable_mosaic.version = 11 : i64} {
  func.func @kernel(%arg0: i32, %arg1: memref<16x128xbf16, #tpu.memory_space<vmem>>, %arg2: memref<128x128xbf16, #tpu.memory_space<vmem>>, %arg3: memref<128x128xbf16, #tpu.memory_space<vmem>>, %arg4: memref<128x128xbf16, #tpu.memory_space<vmem>>, %arg5: memref<1x128xf32, #tpu.memory_space<vmem>>, %arg6: memref<1x128xf32, #tpu.memory_space<vmem>>, %arg7: memref<1x128xf32, #tpu.memory_space<vmem>>, %arg8: memref<16x128xf32, #tpu.memory_space<vmem>>, %arg9: memref<16x128xbf16, #tpu.memory_space<vmem>>) attributes {dimension_semantics = [#tpu.dimension_semantics<parallel>], iteration_bounds = array<i64: 1>, scalar_prefetch = 0 : i64, scratch_operands = 1 : i64, tpu.core_type = #tpu.core_type<tc>, window_params = [{transform_indices = @transform_0, window_bounds = array<i64: 16, 128>}, {pipeline_mode = #tpu.pipeline_mode<synchronous>, transform_indices = @transform_1, window_bounds = array<i64: 128, 128>}, {pipeline_mode = #tpu.pipeline_mode<synchronous>, transform_indices = @transform_2, window_bounds = array<i64: 128, 128>}, {pipeline_mode = #tpu.pipeline_mode<synchronous>, transform_indices = @transform_3, window_bounds = array<i64: 128, 128>}, {pipeline_mode = #tpu.pipeline_mode<synchronous>, transform_indices = @transform_4, window_bounds = array<i64: 1, 128>}, {pipeline_mode = #tpu.pipeline_mode<synchronous>, transform_indices = @transform_5, window_bounds = array<i64: 1, 128>}, {pipeline_mode = #tpu.pipeline_mode<synchronous>, transform_indices = @transform_6, window_bounds = array<i64: 1, 128>}, {transform_indices = @transform_7, window_bounds = array<i64: 16, 128>}]} {
    %c0 = arith.constant 0 : index
    %c0_0 = arith.constant 0 : index
    %0 = vector.load %arg1[%c0, %c0_0] : memref<16x128xbf16, #tpu.memory_space<vmem>>, vector<16x128xbf16>
    %c0_1 = arith.constant 0 : index
    %c0_2 = arith.constant 0 : index
    %1 = vector.load %arg2[%c0_1, %c0_2] : memref<128x128xbf16, #tpu.memory_space<vmem>>, vector<128x128xbf16>
    %cst = arith.constant dense<0.000000e+00> : vector<16x128xf32>
    %2 = tpu.matmul %0, %1, %cst {dimension_numbers = #tpu.dot_dimension_numbers<[1], [0], [0], [1], [0, 0, 1, 1], [], []>} : vector<16x128xbf16>, vector<128x128xbf16>, vector<16x128xf32> -> vector<16x128xf32>
    %c0_3 = arith.constant 0 : index
    %c0_4 = arith.constant 0 : index
    %3 = vector.load %arg5[%c0_3, %c0_4] : memref<1x128xf32, #tpu.memory_space<vmem>>, vector<1x128xf32>
    %4 = vector.broadcast %3 : vector<1x128xf32> to vector<16x128xf32>
    %5 = arith.addf %2, %4 : vector<16x128xf32>
    %cst_5 = arith.constant 0.000000e+00 : f32
    %6 = vector.broadcast %cst_5 : f32 to vector<16x128xf32>
    %7 = arith.maximumf %5, %6 : vector<16x128xf32>
    %8 = arith.truncf %7 : vector<16x128xf32> to vector<16x128xbf16>
    %c0_6 = arith.constant 0 : index
    %c0_7 = arith.constant 0 : index
    %9 = vector.load %arg9[%c0_6, %c0_7] : memref<16x128xbf16, #tpu.memory_space<vmem>>, vector<16x128xbf16>
    tpu.vector_store %arg9[%c0_6, %c0_7], %8 {strides = array<i32>} : memref<16x128xbf16, #tpu.memory_space<vmem>>, vector<16x128xbf16>,
    %c0_8 = arith.constant 0 : index
    %c0_9 = arith.constant 0 : index
    %10 = vector.load %arg9[%c0_8, %c0_9] : memref<16x128xbf16, #tpu.memory_space<vmem>>, vector<16x128xbf16>
    %c0_10 = arith.constant 0 : index
    %c0_11 = arith.constant 0 : index
    %11 = vector.load %arg3[%c0_10, %c0_11] : memref<128x128xbf16, #tpu.memory_space<vmem>>, vector<128x128xbf16>
    %cst_12 = arith.constant dense<0.000000e+00> : vector<16x128xf32>
    %12 = tpu.matmul %10, %11, %cst_12 {dimension_numbers = #tpu.dot_dimension_numbers<[1], [0], [0], [1], [0, 0, 1, 1], [], []>} : vector<16x128xbf16>, vector<128x128xbf16>, vector<16x128xf32> -> vector<16x128xf32>
    %c0_13 = arith.constant 0 : index
    %c0_14 = arith.constant 0 : index
    %13 = vector.load %arg6[%c0_13, %c0_14] : memref<1x128xf32, #tpu.memory_space<vmem>>, vector<1x128xf32>
    %14 = vector.broadcast %13 : vector<1x128xf32> to vector<16x128xf32>
    %15 = arith.addf %12, %14 : vector<16x128xf32>
    %cst_15 = arith.constant 0.000000e+00 : f32
    %16 = vector.broadcast %cst_15 : f32 to vector<16x128xf32>
    %17 = arith.maximumf %15, %16 : vector<16x128xf32>
    %18 = arith.truncf %17 : vector<16x128xf32> to vector<16x128xbf16>
    %c0_16 = arith.constant 0 : index
    %c0_17 = arith.constant 0 : index
    %19 = vector.load %arg9[%c0_16, %c0_17] : memref<16x128xbf16, #tpu.memory_space<vmem>>, vector<16x128xbf16>
    tpu.vector_store %arg9[%c0_16, %c0_17], %18 {strides = array<i32>} : memref<16x128xbf16, #tpu.memory_space<vmem>>, vector<16x128xbf16>,
    %c0_18 = arith.constant 0 : index
    %c0_19 = arith.constant 0 : index
    %20 = vector.load %arg9[%c0_18, %c0_19] : memref<16x128xbf16, #tpu.memory_space<vmem>>, vector<16x128xbf16>
    %c0_20 = arith.constant 0 : index
    %c0_21 = arith.constant 0 : index
    %21 = vector.load %arg4[%c0_20, %c0_21] : memref<128x128xbf16, #tpu.memory_space<vmem>>, vector<128x128xbf16>
    %cst_22 = arith.constant dense<0.000000e+00> : vector<16x128xf32>
    %22 = tpu.matmul %20, %21, %cst_22 {dimension_numbers = #tpu.dot_dimension_numbers<[1], [0], [0], [1], [0, 0, 1, 1], [], []>} : vector<16x128xbf16>, vector<128x128xbf16>, vector<16x128xf32> -> vector<16x128xf32>
    %c0_23 = arith.constant 0 : index
    %c0_24 = arith.constant 0 : index
    %23 = vector.load %arg7[%c0_23, %c0_24] : memref<1x128xf32, #tpu.memory_space<vmem>>, vector<1x128xf32>
    %24 = vector.broadcast %23 : vector<1x128xf32> to vector<16x128xf32>
    %25 = arith.addf %22, %24 : vector<16x128xf32>
    %c0_25 = arith.constant 0 : index
    %c0_26 = arith.constant 0 : index
    %26 = vector.load %arg8[%c0_25, %c0_26] : memref<16x128xf32, #tpu.memory_space<vmem>>, vector<16x128xf32>
    tpu.vector_store %arg8[%c0_25, %c0_26], %25 {strides = array<i32>} : memref<16x128xf32, #tpu.memory_space<vmem>>, vector<16x128xf32>,
    return
  }
  func.func @transform_0(%arg0: i32) -> (i32, i32) {
    %c0_i32 = arith.constant 0 : i32
    %c0_i32_0 = arith.constant 0 : i32
    return %arg0, %c0_i32 : i32, i32
  }
  func.func @transform_1(%arg0: i32) -> (i32, i32) {
    %c0_i32 = arith.constant 0 : i32
    %c0_i32_0 = arith.constant 0 : i32
    %c0_i32_1 = arith.constant 0 : i32
    return %c0_i32, %c0_i32_0 : i32, i32
  }
  func.func @transform_2(%arg0: i32) -> (i32, i32) {
    %c0_i32 = arith.constant 0 : i32
    %c0_i32_0 = arith.constant 0 : i32
    %c0_i32_1 = arith.constant 0 : i32
    return %c0_i32, %c0_i32_0 : i32, i32
  }
  func.func @transform_3(%arg0: i32) -> (i32, i32) {
    %c0_i32 = arith.constant 0 : i32
    %c0_i32_0 = arith.constant 0 : i32
    %c0_i32_1 = arith.constant 0 : i32
    return %c0_i32, %c0_i32_0 : i32, i32
  }
  func.func @transform_4(%arg0: i32) -> (i32, i32) {
    %c0_i32 = arith.constant 0 : i32
    %c0_i32_0 = arith.constant 0 : i32
    %c0_i32_1 = arith.constant 0 : i32
    return %c0_i32, %c0_i32_0 : i32, i32
  }
  func.func @transform_5(%arg0: i32) -> (i32, i32) {
    %c0_i32 = arith.constant 0 : i32
    %c0_i32_0 = arith.constant 0 : i32
    %c0_i32_1 = arith.constant 0 : i32
    return %c0_i32, %c0_i32_0 : i32, i32
  }
  func.func @transform_6(%arg0: i32) -> (i32, i32) {
    %c0_i32 = arith.constant 0 : i32
    %c0_i32_0 = arith.constant 0 : i32
    %c0_i32_1 = arith.constant 0 : i32
    return %c0_i32, %c0_i32_0 : i32, i32
  }
  func.func @transform_7(%arg0: i32) -> (i32, i32) {
    %c0_i32 = arith.constant 0 : i32
    %c0_i32_0 = arith.constant 0 : i32
    return %arg0, %c0_i32 : i32, i32
  }
}

</mosaic_0001>

<llo_original>
// kernel: tpu_custom_call.1
$region0: #{tpu_custom_call.1}
  #allocation0 [shape = 'u32[]', space=smem, size = 0x4, offset = 0x4, fixed_abs, tag = 'smem constant byte address 0x4 - core index']
  #allocation1 [shape = 'u32[72,128]{1,0:T(1,128)}', space=vmem, size = 0x9000, scoped, tag = 'internal scratch']
  #allocation2 [shape = 'bf16[16,128]{1,0:T(8,128)(2,1)}', space=vmem, size = 0x1000, scoped, tag = 'scratch operand']
  %s0 = inlined_call_operand.hbm [shape: bf16[16,128], index: 0, kind: input, shape index: {}]
  %s1 = inlined_call_operand.hbm [shape: bf16[128,128], index: 1, kind: input, shape index: {}]
  %s2 = inlined_call_operand.hbm [shape: bf16[128,128], index: 2, kind: input, shape index: {}]
  %s3 = inlined_call_operand.hbm [shape: bf16[128,128], index: 3, kind: input, shape index: {}]
  %s4 = inlined_call_operand.vmem [shape: f32[1,128], index: 4, kind: input, shape index: {}]
  %s5 = inlined_call_operand.vmem [shape: f32[1,128], index: 5, kind: input, shape index: {}]
  %s6 = inlined_call_operand.vmem [shape: f32[1,128], index: 6, kind: input, shape index: {}]
  %s7 = inlined_call_operand.hbm [shape: f32[16,128], index: 7, kind: output, shape index: {}]
  %s8 = sld [smem:[#allocation0]]
  $region54: #{tpu_custom_call.1} parent=0
    _
  %s10 = ssub.s32 1, %s8
  %s11 = scalar_select 0, %s10, %s8
  $region1: #{tpu_custom_call.1} parent=0
    #allocation3 [shape = 'u8[4096]{0}', space=vmem, size = 0x1000, scoped, tag = 'input window, operand 0, single buffered']
    #allocation4 [shape = 's32[1]{0}', space=sflag, size = 0x4, scoped, tag = 'scoped memory for tpu_custom_call.1']
    #allocation5 [shape = 's32[1]{0}', space=sflag, size = 0x4, scoped, tag = 'scoped memory for tpu_custom_call.1']
    #allocation6 [shape = 'u8[32768]{0}', space=vmem, size = 0x8000, scoped, tag = 'input window, operand 1, single buffered']
    #allocation7 [shape = 's32[1]{0}', space=sflag, size = 0x4, scoped, tag = 'scoped memory for tpu_custom_call.1']
    #allocation8 [shape = 'u8[32768]{0}', space=vmem, size = 0x8000, scoped, tag = 'input window, operand 2, single buffered']
    #allocation9 [shape = 'u8[32768]{0}', space=vmem, size = 0x8000, scoped, tag = 'input window, operand 3, single buffered']
    #allocation10 [shape = 's32[1]{0}', space=sflag, size = 0x4, scoped, tag = 'scoped memory for tpu_custom_call.1']
    #allocation11 [shape = 'u8[8192]{0}', space=vmem, size = 0x2000, scoped, tag = 'output window, operand 0, single buffered']
    %12 = vsyncpa [#allocation4], 0
    %13 = vsyncpa [#allocation7], 0
    %14 = vsyncpa [#allocation10], 0
    %15 = vsyncpa [#allocation5], 0
    // Predicated region
    $region2: #{tpu_custom_call.1} parent=1 // pred_check
      _
    $region3: #{tpu_custom_call.1} parent=1 // pred_check_branch
      %17 = sbr.rel (0) target = $region5
    $region4: #{tpu_custom_call.1} parent=1 // pred_region
      %19 = vsyncadd [#allocation4], 0
      %s20 = sshll.u32 %s0, 4
      %s21 = int_to_ptr.hbm [resolvable:$true] %s20
      %s22 = sshll.u32 [#allocation3], 4
      %s23 = int_to_ptr.vmem [resolvable:$true] %s22
      %28 = dma.hbm_to_vmem [thread:$0]  %s21, 128, %s23, [#allocation4], 64, 64, 4
    $region5: #{tpu_custom_call.1} parent=1 // pred_fallthru
      _
    // Predicated region
    $region6: #{tpu_custom_call.1} parent=1 // pred_check
      _
    $region7: #{tpu_custom_call.1} parent=1 // pred_check_branch
      %30 = sbr.rel (0) target = $region9
    $region8: #{tpu_custom_call.1} parent=1 // pred_region
      %32 = vsyncadd [#allocation7], 0
      %s33 = sshll.u32 %s1, 4
      %s34 = int_to_ptr.hbm [resolvable:$true] %s33
      %s35 = sshll.u32 [#allocation6], 4
      %s36 = int_to_ptr.vmem [resolvable:$true] %s35
      %41 = dma.hbm_to_vmem [thread:$0]  %s34, 1024, %s36, [#allocation7], 64, 64, 4
    $region9: #{tpu_custom_call.1} parent=1 // pred_fallthru
      _
    // Predicated region
    $region10: #{tpu_custom_call.1} parent=1 // pred_check
      _
    $region11: #{tpu_custom_call.1} parent=1 // pred_check_branch
      %43 = sbr.rel (0) target = $region13
    $region12: #{tpu_custom_call.1} parent=1 // pred_region
      %45 = vsyncadd [#allocation7], 0
      %s46 = sshll.u32 %s2, 4
      %s47 = int_to_ptr.hbm [resolvable:$true] %s46
      %s48 = sshll.u32 [#allocation8], 4
      %s49 = int_to_ptr.vmem [resolvable:$true] %s48
      %54 = dma.hbm_to_vmem [thread:$0]  %s47, 1024, %s49, [#allocation7], 64, 64, 4
    $region13: #{tpu_custom_call.1} parent=1 // pred_fallthru
      _
    // Predicated region
    $region14: #{tpu_custom_call.1} parent=1 // pred_check
      _
    $region15: #{tpu_custom_call.1} parent=1 // pred_check_branch
      %56 = sbr.rel (0) target = $region17
    $region16: #{tpu_custom_call.1} parent=1 // pred_region
      %58 = vsyncadd [#allocation10], 0
      %s59 = sshll.u32 %s3, 4
      %s60 = int_to_ptr.hbm [resolvable:$true] %s59
      %s61 = sshll.u32 [#allocation9], 4
      %s62 = int_to_ptr.vmem [resolvable:$true] %s61
      %67 = dma.hbm_to_vmem [thread:$0]  %s60, 1024, %s62, [#allocation10], 64, 64, 4
    $region17: #{tpu_custom_call.1} parent=1 // pred_fallthru
      _
    // Predicated region
    $region18: #{tpu_custom_call.1} parent=1 // pred_check
      _
    $region19: #{tpu_custom_call.1} parent=1 // pred_check_branch
      %69 = sbr.rel (0) target = $region21
    $region20: #{tpu_custom_call.1} parent=1 // pred_region
      _
    $region21: #{tpu_custom_call.1} parent=1 // pred_fallthru
      _
    // Predicated region
    $region22: #{tpu_custom_call.1} parent=1 // pred_check
      _
    $region23: #{tpu_custom_call.1} parent=1 // pred_check_branch
      %71 = sbr.rel (0) target = $region25
    $region24: #{tpu_custom_call.1} parent=1 // pred_region
      _
    $region25: #{tpu_custom_call.1} parent=1 // pred_fallthru
      _
    // Predicated region
    $region26: #{tpu_custom_call.1} parent=1 // pred_check
      _
    $region27: #{tpu_custom_call.1} parent=1 // pred_check_branch
      %73 = sbr.rel (0) target = $region29
    $region28: #{tpu_custom_call.1} parent=1 // pred_region
      _
    $region29: #{tpu_custom_call.1} parent=1 // pred_fallthru
      _
    // Predicated region
    $region30: #{tpu_custom_call.1} parent=1 // pred_check
      _
    $region31: #{tpu_custom_call.1} parent=1 // pred_check_branch
      %75 = sbr.rel (0) target = $region33
    $region32: #{tpu_custom_call.1} parent=1 // pred_region
      %77 = dma.done [#allocation4], 128
    $region33: #{tpu_custom_call.1} parent=1 // pred_fallthru
      _
    // Predicated region
    $region34: #{tpu_custom_call.1} parent=1 // pred_check
      _
    $region35: #{tpu_custom_call.1} parent=1 // pred_check_branch
      %79 = sbr.rel (0) target = $region37
    $region36: #{tpu_custom_call.1} parent=1 // pred_region
      %81 = dma.done [#allocation7], 1024
    $region37: #{tpu_custom_call.1} parent=1 // pred_fallthru
      _
    // Predicated region
    $region38: #{tpu_custom_call.1} parent=1 // pred_check
      _
    $region39: #{tpu_custom_call.1} parent=1 // pred_check_branch
      %83 = sbr.rel (0) target = $region41
    $region40: #{tpu_custom_call.1} parent=1 // pred_region
      %85 = dma.done [#allocation7], 1024
    $region41: #{tpu_custom_call.1} parent=1 // pred_fallthru
      _
    // Predicated region
    $region42: #{tpu_custom_call.1} parent=1 // pred_check
      _
    $region43: #{tpu_custom_call.1} parent=1 // pred_check_branch
      %87 = sbr.rel (0) target = $region45
    $region44: #{tpu_custom_call.1} parent=1 // pred_region
      %89 = dma.done [#allocation10], 1024
    $region45: #{tpu_custom_call.1} parent=1 // pred_fallthru
      _
    %v90 = vld [vmem:[#allocation3] sm:$0xf]
    %v91 = vld [vmem:[#allocation3 + $0x4] sm:$0xf]
    %v92 = vld [vmem:[#allocation6] sm:$0xf]
    %v93 = vld [vmem:[#allocation6 + $0x4] sm:$0xf]
    %v94 = vld [vmem:[#allocation6 + $0x8] sm:$0xf]
    %v95 = vld [vmem:[#allocation6 + $0xc] sm:$0xf]
    %v96 = vld [vmem:[#allocation6 + $0x10] sm:$0xf]
    %v97 = vld [vmem:[#allocation6 + $0x14] sm:$0xf]
    %v98 = vld [vmem:[#allocation6 + $0x18] sm:$0xf]
    %v99 = vld [vmem:[#allocation6 + $0x1c] sm:$0xf]
    %v100 = vld [vmem:[#allocation6 + $0x20] sm:$0xf]
    %v101 = vld [vmem:[#allocation6 + $0x24] sm:$0xf]
    %v102 = vld [vmem:[#allocation6 + $0x28] sm:$0xf]
    %v103 = vld [vmem:[#allocation6 + $0x2c] sm:$0xf]
    %v104 = vld [vmem:[#allocation6 + $0x30] sm:$0xf]
    %v105 = vld [vmem:[#allocation6 + $0x34] sm:$0xf]
    %v106 = vld [vmem:[#allocation6 + $0x38] sm:$0xf]
    %v107 = vld [vmem:[#allocation6 + $0x3c] sm:$0xf]
    %v108 = vld [vmem:[%s4] sm:$0x1]
    %v110 = vperm.slane %v108, 0
    %v114 = vunpack.c.l.b16 %v90
    %v115 = vunpack.c.l.b16 %v91
    %v116 = vpack.c.b16 %v115, %v114
    %v134 = vunpack.c.l.b16 %v92
    %v135 = vunpack.c.l.b16 %v93
    %v136 = vunpack.c.l.b16 %v94
    %v137 = vunpack.c.l.b16 %v95
    %v138 = vunpack.c.l.b16 %v96
    %v139 = vunpack.c.l.b16 %v97
    %v140 = vunpack.c.l.b16 %v98
    %v141 = vunpack.c.l.b16 %v99
    %v142 = vunpack.c.l.b16 %v100
    %v143 = vunpack.c.l.b16 %v101
    %v144 = vunpack.c.l.b16 %v102
    %v145 = vunpack.c.l.b16 %v103
    %v146 = vunpack.c.l.b16 %v104
    %v147 = vunpack.c.l.b16 %v105
    %v148 = vunpack.c.l.b16 %v106
    %v149 = vunpack.c.l.b16 %v107
    %v150 = vpack.c.b16 %v135, %v134
    %v151 = vpack.c.b16 %v137, %v136
    %v152 = vpack.c.b16 %v139, %v138
    %v153 = vpack.c.b16 %v141, %v140
    %v154 = vpack.c.b16 %v143, %v142
    %v155 = vpack.c.b16 %v145, %v144
    %v156 = vpack.c.b16 %v147, %v146
    %v157 = vpack.c.b16 %v149, %v148
    %166 = vmatpush.bf16.msra.mxu0 %v157
    %167 = vmatpush.bf16.msra.mxu0 %v156
    %168 = vmatpush.bf16.msra.mxu0 %v155
    %169 = vmatpush.bf16.msra.mxu0 %v154
    %170 = vmatpush.bf16.msra.mxu0 %v153
    %171 = vmatpush.bf16.msra.mxu0 %v152
    %172 = vmatpush.bf16.msra.mxu0 %v151
    %173 = vmatpush.bf16.msra.mxu0 %v150
    %174 = vmatmul.bf16.gmra.mxu0 %v116
    %v175 = vpop.f32.mrf.mxu0
    %v176 = vadd.f32 %v110, %v175
    %v177 = vpop.f32.mrf.mxu0
    %v178 = vadd.f32 %v110, %v177
    %179 = vdwg.mxu0
    %v180 = vmax.f32 %v176, 0.0
    %v181 = vmax.f32 %v178, 0.0
    %v182 = vpack.c.bf16 %v180, %v180
    %v183 = vpack.c.bf16 %v181, %v181
    %184 = vst [vmem:[#allocation2] sm:$0xf] %v182
    %185 = vst [vmem:[#allocation2 + $0x4] sm:$0xf] %v183
    %v186 = vld [vmem:[#allocation2] sm:$0xf]
    %v187 = vld [vmem:[#allocation2 + $0x4] sm:$0xf]
    %v188 = vld [vmem:[#allocation8] sm:$0xf]
    %v189 = vld [vmem:[#allocation8 + $0x4] sm:$0xf]
    %v190 = vld [vmem:[#allocation8 + $0x8] sm:$0xf]
    %v191 = vld [vmem:[#allocation8 + $0xc] sm:$0xf]
    %v192 = vld [vmem:[#allocation8 + $0x10] sm:$0xf]
    %v193 = vld [vmem:[#allocation8 + $0x14] sm:$0xf]
    %v194 = vld [vmem:[#allocation8 + $0x18] sm:$0xf]
    %v195 = vld [vmem:[#allocation8 + $0x1c] sm:$0xf]
    %v196 = vld [vmem:[#allocation8 + $0x20] sm:$0xf]
    %v197 = vld [vmem:[#allocation8 + $0x24] sm:$0xf]
    %v198 = vld [vmem:[#allocation8 + $0x28] sm:$0xf]
    %v199 = vld [vmem:[#allocation8 + $0x2c] sm:$0xf]
    %v200 = vld [vmem:[#allocation8 + $0x30] sm:$0xf]
    %v201 = vld [vmem:[#allocation8 + $0x34] sm:$0xf]
    %v202 = vld [vmem:[#allocation8 + $0x38] sm:$0xf]
    %v203 = vld [vmem:[#allocation8 + $0x3c] sm:$0xf]
    %v204 = vld [vmem:[%s5] sm:$0x1]
    %v206 = vperm.slane %v204, 0
    %v210 = vunpack.c.l.b16 %v186
    %v211 = vunpack.c.l.b16 %v187
    %v212 = vpack.c.b16 %v211, %v210
    %v230 = vunpack.c.l.b16 %v188
    %v231 = vunpack.c.l.b16 %v189
    %v232 = vunpack.c.l.b16 %v190
    %v233 = vunpack.c.l.b16 %v191
    %v234 = vunpack.c.l.b16 %v192
    %v235 = vunpack.c.l.b16 %v193
    %v236 = vunpack.c.l.b16 %v194
    %v237 = vunpack.c.l.b16 %v195
    %v238 = vunpack.c.l.b16 %v196
    %v239 = vunpack.c.l.b16 %v197
    %v240 = vunpack.c.l.b16 %v198
    %v241 = vunpack.c.l.b16 %v199
    %v242 = vunpack.c.l.b16 %v200
    %v243 = vunpack.c.l.b16 %v201
    %v244 = vunpack.c.l.b16 %v202
    %v245 = vunpack.c.l.b16 %v203
    %v246 = vpack.c.b16 %v231, %v230
    %v247 = vpack.c.b16 %v233, %v232
    %v248 = vpack.c.b16 %v235, %v234
    %v249 = vpack.c.b16 %v237, %v236
    %v250 = vpack.c.b16 %v239, %v238
    %v251 = vpack.c.b16 %v241, %v240
    %v252 = vpack.c.b16 %v243, %v242
    %v253 = vpack.c.b16 %v245, %v244
    %262 = vmatpush.bf16.msra.mxu0 %v253
    %263 = vmatpush.bf16.msra.mxu0 %v252
    %264 = vmatpush.bf16.msra.mxu0 %v251
    %265 = vmatpush.bf16.msra.mxu0 %v250
    %266 = vmatpush.bf16.msra.mxu0 %v249
    %267 = vmatpush.bf16.msra.mxu0 %v248
    %268 = vmatpush.bf16.msra.mxu0 %v247
    %269 = vmatpush.bf16.msra.mxu0 %v246
    %270 = vmatmul.bf16.gmra.mxu0 %v212
    %v271 = vpop.f32.mrf.mxu0
    %v272 = vadd.f32 %v206, %v271
    %v273 = vpop.f32.mrf.mxu0
    %v274 = vadd.f32 %v206, %v273
    %275 = vdwg.mxu0
    %v276 = vmax.f32 %v272, 0.0
    %v277 = vmax.f32 %v274, 0.0
    %v278 = vpack.c.bf16 %v276, %v276
    %v279 = vpack.c.bf16 %v277, %v277
    %280 = vst [vmem:[#allocation2] sm:$0xf] %v278
    %281 = vst [vmem:[#allocation2 + $0x4] sm:$0xf] %v279
    %v282 = vld [vmem:[#allocation2] sm:$0xf]
    %v283 = vld [vmem:[#allocation2 + $0x4] sm:$0xf]
    %v284 = vld [vmem:[#allocation9] sm:$0xf]
    %v285 = vld [vmem:[#allocation9 + $0x4] sm:$0xf]
    %v286 = vld [vmem:[#allocation9 + $0x8] sm:$0xf]
    %v287 = vld [vmem:[#allocation9 + $0xc] sm:$0xf]
    %v288 = vld [vmem:[#allocation9 + $0x10] sm:$0xf]
    %v289 = vld [vmem:[#allocation9 + $0x14] sm:$0xf]
    %v290 = vld [vmem:[#allocation9 + $0x18] sm:$0xf]
    %v291 = vld [vmem:[#allocation9 + $0x1c] sm:$0xf]
    %v292 = vld [vmem:[#allocation9 + $0x20] sm:$0xf]
    %v293 = vld [vmem:[#allocation9 + $0x24] sm:$0xf]
    %v294 = vld [vmem:[#allocation9 + $0x28] sm:$0xf]
    %v295 = vld [vmem:[#allocation9 + $0x2c] sm:$0xf]
    %v296 = vld [vmem:[#allocation9 + $0x30] sm:$0xf]
    %v297 = vld [vmem:[#allocation9 + $0x34] sm:$0xf]
    %v298 = vld [vmem:[#allocation9 + $0x38] sm:$0xf]
    %v299 = vld [vmem:[#allocation9 + $0x3c] sm:$0xf]
    %v300 = vld [vmem:[%s6] sm:$0x1]
    %v302 = vperm.slane %v300, 0
    %v306 = vunpack.c.l.b16 %v282
    %v307 = vunpack.c.l.b16 %v283
    %v308 = vpack.c.b16 %v307, %v306
    %v326 = vunpack.c.l.b16 %v284
    %v327 = vunpack.c.l.b16 %v285
    %v328 = vunpack.c.l.b16 %v286
    %v329 = vunpack.c.l.b16 %v287
    %v330 = vunpack.c.l.b16 %v288
    %v331 = vunpack.c.l.b16 %v289
    %v332 = vunpack.c.l.b16 %v290
    %v333 = vunpack.c.l.b16 %v291
    %v334 = vunpack.c.l.b16 %v292
    %v335 = vunpack.c.l.b16 %v293
    %v336 = vunpack.c.l.b16 %v294
    %v337 = vunpack.c.l.b16 %v295
    %v338 = vunpack.c.l.b16 %v296
    %v339 = vunpack.c.l.b16 %v297
    %v340 = vunpack.c.l.b16 %v298
    %v341 = vunpack.c.l.b16 %v299
    %v342 = vpack.c.b16 %v327, %v326
    %v343 = vpack.c.b16 %v329, %v328
    %v344 = vpack.c.b16 %v331, %v330
    %v345 = vpack.c.b16 %v333, %v332
    %v346 = vpack.c.b16 %v335, %v334
    %v347 = vpack.c.b16 %v337, %v336
    %v348 = vpack.c.b16 %v339, %v338
    %v349 = vpack.c.b16 %v341, %v340
    %358 = vmatpush.bf16.msra.mxu0 %v349
    %359 = vmatpush.bf16.msra.mxu0 %v348
    %360 = vmatpush.bf16.msra.mxu0 %v347
    %361 = vmatpush.bf16.msra.mxu0 %v346
    %362 = vmatpush.bf16.msra.mxu0 %v345
    %363 = vmatpush.bf16.msra.mxu0 %v344
    %364 = vmatpush.bf16.msra.mxu0 %v343
    %365 = vmatpush.bf16.msra.mxu0 %v342
    %366 = vmatmul.bf16.gmra.mxu0 %v308
    %v367 = vpop.f32.mrf.mxu0
    %v368 = vadd.f32 %v302, %v367
    %v369 = vpop.f32.mrf.mxu0
    %v370 = vadd.f32 %v302, %v369
    %371 = vdwg.mxu0
    %372 = vst [vmem:[#allocation11] sm:$0xff] %v368
    %373 = vst [vmem:[#allocation11 + $0x8] sm:$0xff] %v370
    // Predicated region
    $region46: #{tpu_custom_call.1} parent=1 // pred_check
      _
    $region47: #{tpu_custom_call.1} parent=1 // pred_check_branch
      %375 = sbr.rel (0) target = $region49
    $region48: #{tpu_custom_call.1} parent=1 // pred_region
      %377 = vsyncadd [#allocation5], 0
      %s378 = sshll.u32 [#allocation11], 4
      %s379 = int_to_ptr.vmem [resolvable:$true] %s378
      %s380 = sshll.u32 %s7, 4
      %s381 = int_to_ptr.hbm [resolvable:$true] %s380
      %386 = dma.vmem_to_hbm [thread:$0]  %s379, 256, %s381, [#allocation5], 128, 128, 8
    $region49: #{tpu_custom_call.1} parent=1 // pred_fallthru
      _
    // Predicated region
    $region50: #{tpu_custom_call.1} parent=1 // pred_check
      _
    $region51: #{tpu_custom_call.1} parent=1 // pred_check_branch
      %388 = sbr.rel (0) target = $region53
    $region52: #{tpu_custom_call.1} parent=1 // pred_region
      %390 = dma.done [#allocation5], 256
    $region53: #{tpu_custom_call.1} parent=1 // pred_fallthru
      _
    %391 = vsyncpa [#allocation4], 1
    %392 = vsyncpa [#allocation7], 1
    %393 = vsyncpa [#allocation10], 1
    %394 = vsyncpa [#allocation5], 1

// kernel: tpu_custom_call.1
$region0: #{tpu_custom_call.1}
  #allocation0 [shape = 'u32[]', space=smem, size = 0x4, offset = 0x4, fixed_abs, tag = 'smem constant byte address 0x4 - core index']
  #allocation1 [shape = 'u32[72,128]{1,0:T(1,128)}', space=vmem, size = 0x9000, scoped, tag = 'internal scratch']
  #allocation2 [shape = 'bf16[16,128]{1,0:T(8,128)(2,1)}', space=vmem, size = 0x1000, scoped, tag = 'scratch operand']
  %s0 = inlined_call_operand.hbm [shape: bf16[16,128], index: 0, kind: input, shape index: {}]
  %s1 = inlined_call_operand.hbm [shape: bf16[128,128], index: 1, kind: input, shape index: {}]
  %s2 = inlined_call_operand.hbm [shape: bf16[128,128], index: 2, kind: input, shape index: {}]
  %s3 = inlined_call_operand.hbm [shape: bf16[128,128], index: 3, kind: input, shape index: {}]
  %s4 = inlined_call_operand.vmem [shape: f32[1,128], index: 4, kind: input, shape index: {}]
  %s5 = inlined_call_operand.vmem [shape: f32[1,128], index: 5, kind: input, shape index: {}]
  %s6 = inlined_call_operand.vmem [shape: f32[1,128], index: 6, kind: input, shape index: {}]
  %s7 = inlined_call_operand.hbm [shape: f32[16,128], index: 7, kind: output, shape index: {}]
  %s8 = sld [smem:[#allocation0]]
  $region54: #{tpu_custom_call.1} parent=0
    _
  %s10 = ssub.s32 1, %s8
  %s11 = scalar_select 0, %s10, %s8
  $region1: #{tpu_custom_call.1} parent=0
    #allocation3 [shape = 'u8[4096]{0}', space=vmem, size = 0x1000, scoped, tag = 'input window, operand 0, single buffered']
    #allocation4 [shape = 's32[1]{0}', space=sflag, size = 0x4, scoped, tag = 'scoped memory for tpu_custom_call.1']
    #allocation5 [shape = 's32[1]{0}', space=sflag, size = 0x4, scoped, tag = 'scoped memory for tpu_custom_call.1']
    #allocation6 [shape = 'u8[32768]{0}', space=vmem, size = 0x8000, scoped, tag = 'input window, operand 1, single buffered']
    #allocation7 [shape = 's32[1]{0}', space=sflag, size = 0x4, scoped, tag = 'scoped memory for tpu_custom_call.1']
    #allocation8 [shape = 'u8[32768]{0}', space=vmem, size = 0x8000, scoped, tag = 'input window, operand 2, single buffered']
    #allocation9 [shape = 'u8[32768]{0}', space=vmem, size = 0x8000, scoped, tag = 'input window, operand 3, single buffered']
    #allocation10 [shape = 's32[1]{0}', space=sflag, size = 0x4, scoped, tag = 'scoped memory for tpu_custom_call.1']
    #allocation11 [shape = 'u8[8192]{0}', space=vmem, size = 0x2000, scoped, tag = 'output window, operand 0, single buffered']
    %12 = vsyncpa [#allocation4], 0
    %13 = vsyncpa [#allocation7], 0
    %14 = vsyncpa [#allocation10], 0
    %15 = vsyncpa [#allocation5], 0
    // Predicated region
    $region2: #{tpu_custom_call.1} parent=1 // pred_check
      _
    $region3: #{tpu_custom_call.1} parent=1 // pred_check_branch
      %17 = sbr.rel (0) target = $region5
    $region4: #{tpu_custom_call.1} parent=1 // pred_region
      %19 = vsyncadd [#allocation4], 0
      %s20 = sshll.u32 %s0, 4
      %s21 = int_to_ptr.hbm [resolvable:$true] %s20
      %s22 = sshll.u32 [#allocation3], 4
      %s23 = int_to_ptr.vmem [resolvable:$true] %s22
      %28 = dma.hbm_to_vmem [thread:$0]  %s21, 128, %s23, [#allocation4], 64, 64, 4
    $region5: #{tpu_custom_call.1} parent=1 // pred_fallthru
      _
    // Predicated region
    $region6: #{tpu_custom_call.1} parent=1 // pred_check
      _
    $region7: #{tpu_custom_call.1} parent=1 // pred_check_branch
      %30 = sbr.rel (0) target = $region9
    $region8: #{tpu_custom_call.1} parent=1 // pred_region
      %32 = vsyncadd [#allocation7], 0
      %s33 = sshll.u32 %s1, 4
      %s34 = int_to_ptr.hbm [resolvable:$true] %s33
      %s35 = sshll.u32 [#allocation6], 4
      %s36 = int_to_ptr.vmem [resolvable:$true] %s35
      %41 = dma.hbm_to_vmem [thread:$0]  %s34, 1024, %s36, [#allocation7], 64, 64, 4
    $region9: #{tpu_custom_call.1} parent=1 // pred_fallthru
      _
    // Predicated region
    $region10: #{tpu_custom_call.1} parent=1 // pred_check
      _
    $region11: #{tpu_custom_call.1} parent=1 // pred_check_branch
      %43 = sbr.rel (0) target = $region13
    $region12: #{tpu_custom_call.1} parent=1 // pred_region
      %45 = vsyncadd [#allocation7], 0
      %s46 = sshll.u32 %s2, 4
      %s47 = int_to_ptr.hbm [resolvable:$true] %s46
      %s48 = sshll.u32 [#allocation8], 4
      %s49 = int_to_ptr.vmem [resolvable:$true] %s48
      %54 = dma.hbm_to_vmem [thread:$0]  %s47, 1024, %s49, [#allocation7], 64, 64, 4
    $region13: #{tpu_custom_call.1} parent=1 // pred_fallthru
      _
    // Predicated region
    $region14: #{tpu_custom_call.1} parent=1 // pred_check
      _
    $region15: #{tpu_custom_call.1} parent=1 // pred_check_branch
      %56 = sbr.rel (0) target = $region17
    $region16: #{tpu_custom_call.1} parent=1 // pred_region
      %58 = vsyncadd [#allocation10], 0
      %s59 = sshll.u32 %s3, 4
      %s60 = int_to_ptr.hbm [resolvable:$true] %s59
      %s61 = sshll.u32 [#allocation9], 4
      %s62 = int_to_ptr.vmem [resolvable:$true] %s61
      %67 = dma.hbm_to_vmem [thread:$0]  %s60, 1024, %s62, [#allocation10], 64, 64, 4
    $region17: #{tpu_custom_call.1} parent=1 // pred_fallthru
      _
    // Predicated region
    $region18: #{tpu_custom_call.1} parent=1 // pred_check
      _
    $region19: #{tpu_custom_call.1} parent=1 // pred_check_branch
      %69 = sbr.rel (0) target = $region21
    $region20: #{tpu_custom_call.1} parent=1 // pred_region
      _
    $region21: #{tpu_custom_call.1} parent=1 // pred_fallthru
      _
    // Predicated region
    $region22: #{tpu_custom_call.1} parent=1 // pred_check
      _
    $region23: #{tpu_custom_call.1} parent=1 // pred_check_branch
      %71 = sbr.rel (0) target = $region25
    $region24: #{tpu_custom_call.1} parent=1 // pred_region
      _
    $region25: #{tpu_custom_call.1} parent=1 // pred_fallthru
      _
    // Predicated region
    $region26: #{tpu_custom_call.1} parent=1 // pred_check
      _
    $region27: #{tpu_custom_call.1} parent=1 // pred_check_branch
      %73 = sbr.rel (0) target = $region29
    $region28: #{tpu_custom_call.1} parent=1 // pred_region
      _
    $region29: #{tpu_custom_call.1} parent=1 // pred_fallthru
      _
    // Predicated region
    $region30: #{tpu_custom_call.1} parent=1 // pred_check
      _
    $region31: #{tpu_custom_call.1} parent=1 // pred_check_branch
      %75 = sbr.rel (0) target = $region33
    $region32: #{tpu_custom_call.1} parent=1 // pred_region
      %77 = dma.done [#allocation4], 128
    $region33: #{tpu_custom_call.1} parent=1 // pred_fallthru
      _
    // Predicated region
    $region34: #{tpu_custom_call.1} parent=1 // pred_check
      _
    $region35: #{tpu_custom_call.1} parent=1 // pred_check_branch
      %79 = sbr.rel (0) target = $region37
    $region36: #{tpu_custom_call.1} parent=1 // pred_region
      %81 = dma.done [#allocation7], 1024
    $region37: #{tpu_custom_call.1} parent=1 // pred_fallthru
      _
    // Predicated region
    $region38: #{tpu_custom_call.1} parent=1 // pred_check
      _
    $region39: #{tpu_custom_call.1} parent=1 // pred_check_branch
      %83 = sbr.rel (0) target = $region41
    $region40: #{tpu_custom_call.1} parent=1 // pred_region
      %85 = dma.done [#allocation7], 1024
    $region41: #{tpu_custom_call.1} parent=1 // pred_fallthru
      _
    // Predicated region
    $region42: #{tpu_custom_call.1} parent=1 // pred_check
      _
    $region43: #{tpu_custom_call.1} parent=1 // pred_check_branch
      %87 = sbr.rel (0) target = $region45
    $region44: #{tpu_custom_call.1} parent=1 // pred_region
      %89 = dma.done [#allocation10], 1024
    $region45: #{tpu_custom_call.1} parent=1 // pred_fallthru
      _
    %v90 = vld [vmem:[#allocation3] sm:$0xf]
    %v91 = vld [vmem:[#allocation3 + $0x4] sm:$0xf]
    %v92 = vld [vmem:[#allocation6] sm:$0xf]
    %v93 = vld [vmem:[#allocation6 + $0x4] sm:$0xf]
    %v94 = vld [vmem:[#allocation6 + $0x8] sm:$0xf]
    %v95 = vld [vmem:[#allocation6 + $0xc] sm:$0xf]
    %v96 = vld [vmem:[#allocation6 + $0x10] sm:$0xf]
    %v97 = vld [vmem:[#allocation6 + $0x14] sm:$0xf]
    %v98 = vld [vmem:[#allocation6 + $0x18] sm:$0xf]
    %v99 = vld [vmem:[#allocation6 + $0x1c] sm:$0xf]
    %v100 = vld [vmem:[#allocation6 + $0x20] sm:$0xf]
    %v101 = vld [vmem:[#allocation6 + $0x24] sm:$0xf]
    %v102 = vld [vmem:[#allocation6 + $0x28] sm:$0xf]
    %v103 = vld [vmem:[#allocation6 + $0x2c] sm:$0xf]
    %v104 = vld [vmem:[#allocation6 + $0x30] sm:$0xf]
    %v105 = vld [vmem:[#allocation6 + $0x34] sm:$0xf]
    %v106 = vld [vmem:[#allocation6 + $0x38] sm:$0xf]
    %v107 = vld [vmem:[#allocation6 + $0x3c] sm:$0xf]
    %v108 = vld [vmem:[%s4] sm:$0x1]
    %v110 = vperm.slane %v108, 0
    %v114 = vunpack.c.l.b16 %v90
    %v115 = vunpack.c.l.b16 %v91
    %v116 = vpack.c.b16 %v115, %v114
    %v134 = vunpack.c.l.b16 %v92
    %v135 = vunpack.c.l.b16 %v93
    %v136 = vunpack.c.l.b16 %v94
    %v137 = vunpack.c.l.b16 %v95
    %v138 = vunpack.c.l.b16 %v96
    %v139 = vunpack.c.l.b16 %v97
    %v140 = vunpack.c.l.b16 %v98
    %v141 = vunpack.c.l.b16 %v99
    %v142 = vunpack.c.l.b16 %v100
    %v143 = vunpack.c.l.b16 %v101
    %v144 = vunpack.c.l.b16 %v102
    %v145 = vunpack.c.l.b16 %v103
    %v146 = vunpack.c.l.b16 %v104
    %v147 = vunpack.c.l.b16 %v105
    %v148 = vunpack.c.l.b16 %v106
    %v149 = vunpack.c.l.b16 %v107
    %v150 = vpack.c.b16 %v135, %v134
    %v151 = vpack.c.b16 %v137, %v136
    %v152 = vpack.c.b16 %v139, %v138
    %v153 = vpack.c.b16 %v141, %v140
    %v154 = vpack.c.b16 %v143, %v142
    %v155 = vpack.c.b16 %v145, %v144
    %v156 = vpack.c.b16 %v147, %v146
    %v157 = vpack.c.b16 %v149, %v148
    %166 = vmatpush.bf16.msra.mxu0 %v157
    %167 = vmatpush.bf16.msra.mxu0 %v156
    %168 = vmatpush.bf16.msra.mxu0 %v155
    %169 = vmatpush.bf16.msra.mxu0 %v154
    %170 = vmatpush.bf16.msra.mxu0 %v153
    %171 = vmatpush.bf16.msra.mxu0 %v152
    %172 = vmatpush.bf16.msra.mxu0 %v151
    %173 = vmatpush.bf16.msra.mxu0 %v150
    %174 = vmatmul.bf16.gmra.mxu0 %v116
    %v175 = vpop.f32.mrf.mxu0
    %v176 = vadd.f32 %v110, %v175
    %v177 = vpop.f32.mrf.mxu0
    %v178 = vadd.f32 %v110, %v177
    %179 = vdwg.mxu0
    %v180 = vmax.f32 %v176, 0.0
    %v181 = vmax.f32 %v178, 0.0
    %v182 = vpack.c.bf16 %v180, %v180
    %v183 = vpack.c.bf16 %v181, %v181
    %184 = vst [vmem:[#allocation2] sm:$0xf] %v182
    %185 = vst [vmem:[#allocation2 + $0x4] sm:$0xf] %v183
    %v186 = vld [vmem:[#allocation2] sm:$0xf]
    %v187 = vld [vmem:[#allocation2 + $0x4] sm:$0xf]
    %v188 = vld [vmem:[#allocation8] sm:$0xf]
    %v189 = vld [vmem:[#allocation8 + $0x4] sm:$0xf]
    %v190 = vld [vmem:[#allocation8 + $0x8] sm:$0xf]
    %v191 = vld [vmem:[#allocation8 + $0xc] sm:$0xf]
    %v192 = vld [vmem:[#allocation8 + $0x10] sm:$0xf]
    %v193 = vld [vmem:[#allocation8 + $0x14] sm:$0xf]
    %v194 = vld [vmem:[#allocation8 + $0x18] sm:$0xf]
    %v195 = vld [vmem:[#allocation8 + $0x1c] sm:$0xf]
    %v196 = vld [vmem:[#allocation8 + $0x20] sm:$0xf]
    %v197 = vld [vmem:[#allocation8 + $0x24] sm:$0xf]
    %v198 = vld [vmem:[#allocation8 + $0x28] sm:$0xf]
    %v199 = vld [vmem:[#allocation8 + $0x2c] sm:$0xf]
    %v200 = vld [vmem:[#allocation8 + $0x30] sm:$0xf]
    %v201 = vld [vmem:[#allocation8 + $0x34] sm:$0xf]
    %v202 = vld [vmem:[#allocation8 + $0x38] sm:$0xf]
    %v203 = vld [vmem:[#allocation8 + $0x3c] sm:$0xf]
    %v204 = vld [vmem:[%s5] sm:$0x1]
    %v206 = vperm.slane %v204, 0
    %v210 = vunpack.c.l.b16 %v186
    %v211 = vunpack.c.l.b16 %v187
    %v212 = vpack.c.b16 %v211, %v210
    %v230 = vunpack.c.l.b16 %v188
    %v231 = vunpack.c.l.b16 %v189
    %v232 = vunpack.c.l.b16 %v190
    %v233 = vunpack.c.l.b16 %v191
    %v234 = vunpack.c.l.b16 %v192
    %v235 = vunpack.c.l.b16 %v193
    %v236 = vunpack.c.l.b16 %v194
    %v237 = vunpack.c.l.b16 %v195
    %v238 = vunpack.c.l.b16 %v196
    %v239 = vunpack.c.l.b16 %v197
    %v240 = vunpack.c.l.b16 %v198
    %v241 = vunpack.c.l.b16 %v199
    %v242 = vunpack.c.l.b16 %v200
    %v243 = vunpack.c.l.b16 %v201
    %v244 = vunpack.c.l.b16 %v202
    %v245 = vunpack.c.l.b16 %v203
    %v246 = vpack.c.b16 %v231, %v230
    %v247 = vpack.c.b16 %v233, %v232
    %v248 = vpack.c.b16 %v235, %v234
    %v249 = vpack.c.b16 %v237, %v236
    %v250 = vpack.c.b16 %v239, %v238
    %v251 = vpack.c.b16 %v241, %v240
    %v252 = vpack.c.b16 %v243, %v242
    %v253 = vpack.c.b16 %v245, %v244
    %262 = vmatpush.bf16.msra.mxu0 %v253
    %263 = vmatpush.bf16.msra.mxu0 %v252
    %264 = vmatpush.bf16.msra.mxu0 %v251
    %265 = vmatpush.bf16.msra.mxu0 %v250
    %266 = vmatpush.bf16.msra.mxu0 %v249
    %267 = vmatpush.bf16.msra.mxu0 %v248
    %268 = vmatpush.bf16.msra.mxu0 %v247
    %269 = vmatpush.bf16.msra.mxu0 %v246
    %270 = vmatmul.bf16.gmra.mxu0 %v212
    %v271 = vpop.f32.mrf.mxu0
    %v272 = vadd.f32 %v206, %v271
    %v273 = vpop.f32.mrf.mxu0
    %v274 = vadd.f32 %v206, %v273
    %275 = vdwg.mxu0
    %v276 = vmax.f32 %v272, 0.0
    %v277 = vmax.f32 %v274, 0.0
    %v278 = vpack.c.bf16 %v276, %v276
    %v279 = vpack.c.bf16 %v277, %v277
    %280 = vst [vmem:[#allocation2] sm:$0xf] %v278
    %281 = vst [vmem:[#allocation2 + $0x4] sm:$0xf] %v279
    %v282 = vld [vmem:[#allocation2] sm:$0xf]
    %v283 = vld [vmem:[#allocation2 + $0x4] sm:$0xf]
    %v284 = vld [vmem:[#allocation9] sm:$0xf]
    %v285 = vld [vmem:[#allocation9 + $0x4] sm:$0xf]
    %v286 = vld [vmem:[#allocation9 + $0x8] sm:$0xf]
    %v287 = vld [vmem:[#allocation9 + $0xc] sm:$0xf]
    %v288 = vld [vmem:[#allocation9 + $0x10] sm:$0xf]
    %v289 = vld [vmem:[#allocation9 + $0x14] sm:$0xf]
    %v290 = vld [vmem:[#allocation9 + $0x18] sm:$0xf]
    %v291 = vld [vmem:[#allocation9 + $0x1c] sm:$0xf]
    %v292 = vld [vmem:[#allocation9 + $0x20] sm:$0xf]
    %v293 = vld [vmem:[#allocation9 + $0x24] sm:$0xf]
    %v294 = vld [vmem:[#allocation9 + $0x28] sm:$0xf]
    %v295 = vld [vmem:[#allocation9 + $0x2c] sm:$0xf]
    %v296 = vld [vmem:[#allocation9 + $0x30] sm:$0xf]
    %v297 = vld [vmem:[#allocation9 + $0x34] sm:$0xf]
    %v298 = vld [vmem:[#allocation9 + $0x38] sm:$0xf]
    %v299 = vld [vmem:[#allocation9 + $0x3c] sm:$0xf]
    %v300 = vld [vmem:[%s6] sm:$0x1]
    %v302 = vperm.slane %v300, 0
    %v306 = vunpack.c.l.b16 %v282
    %v307 = vunpack.c.l.b16 %v283
    %v308 = vpack.c.b16 %v307, %v306
    %v326 = vunpack.c.l.b16 %v284
    %v327 = vunpack.c.l.b16 %v285
    %v328 = vunpack.c.l.b16 %v286
    %v329 = vunpack.c.l.b16 %v287
    %v330 = vunpack.c.l.b16 %v288
    %v331 = vunpack.c.l.b16 %v289
    %v332 = vunpack.c.l.b16 %v290
    %v333 = vunpack.c.l.b16 %v291
    %v334 = vunpack.c.l.b16 %v292
    %v335 = vunpack.c.l.b16 %v293
    %v336 = vunpack.c.l.b16 %v294
    %v337 = vunpack.c.l.b16 %v295
    %v338 = vunpack.c.l.b16 %v296
    %v339 = vunpack.c.l.b16 %v297
    %v340 = vunpack.c.l.b16 %v298
    %v341 = vunpack.c.l.b16 %v299
    %v342 = vpack.c.b16 %v327, %v326
    %v343 = vpack.c.b16 %v329, %v328
    %v344 = vpack.c.b16 %v331, %v330
    %v345 = vpack.c.b16 %v333, %v332
    %v346 = vpack.c.b16 %v335, %v334
    %v347 = vpack.c.b16 %v337, %v336
    %v348 = vpack.c.b16 %v339, %v338
    %v349 = vpack.c.b16 %v341, %v340
    %358 = vmatpush.bf16.msra.mxu0 %v349
    %359 = vmatpush.bf16.msra.mxu0 %v348
    %360 = vmatpush.bf16.msra.mxu0 %v347
    %361 = vmatpush.bf16.msra.mxu0 %v346
    %362 = vmatpush.bf16.msra.mxu0 %v345
    %363 = vmatpush.bf16.msra.mxu0 %v344
    %364 = vmatpush.bf16.msra.mxu0 %v343
    %365 = vmatpush.bf16.msra.mxu0 %v342
    %366 = vmatmul.bf16.gmra.mxu0 %v308
    %v367 = vpop.f32.mrf.mxu0
    %v368 = vadd.f32 %v302, %v367
    %v369 = vpop.f32.mrf.mxu0
    %v370 = vadd.f32 %v302, %v369
    %371 = vdwg.mxu0
    %372 = vst [vmem:[#allocation11] sm:$0xff] %v368
    %373 = vst [vmem:[#allocation11 + $0x8] sm:$0xff] %v370
    // Predicated region
    $region46: #{tpu_custom_call.1} parent=1 // pred_check
      _
    $region47: #{tpu_custom_call.1} parent=1 // pred_check_branch
      %375 = sbr.rel (0) target = $region49
    $region48: #{tpu_custom_call.1} parent=1 // pred_region
      %377 = vsyncadd [#allocation5], 0
      %s378 = sshll.u32 [#allocation11], 4
      %s379 = int_to_ptr.vmem [resolvable:$true] %s378
      %s380 = sshll.u32 %s7, 4
      %s381 = int_to_ptr.hbm [resolvable:$true] %s380
      %386 = dma.vmem_to_hbm [thread:$0]  %s379, 256, %s381, [#allocation5], 128, 128, 8
    $region49: #{tpu_custom_call.1} parent=1 // pred_fallthru
      _
    // Predicated region
    $region50: #{tpu_custom_call.1} parent=1 // pred_check
      _
    $region51: #{tpu_custom_call.1} parent=1 // pred_check_branch
      %388 = sbr.rel (0) target = $region53
    $region52: #{tpu_custom_call.1} parent=1 // pred_region
      %390 = dma.done [#allocation5], 256
    $region53: #{tpu_custom_call.1} parent=1 // pred_fallthru
      _
    %391 = vsyncpa [#allocation4], 1
    %392 = vsyncpa [#allocation7], 1
    %393 = vsyncpa [#allocation10], 1
    %394 = vsyncpa [#allocation5], 1

</llo_original>
